<compile_context>
chip_gen: v7x
topology: tpu7x:2x2x1
jax: 0.10.0
libtpu: 0.0.40
codegen_flags: <defaults>
</compile_context>

<pallas_src>
import jax
import jax.numpy as jnp
import numpy as np
from jax.experimental import pallas as pl
from jax.experimental.pallas import tpu as pltpu

NUM_FILTERS = 100
F_PAD = 128                        # filters padded to a full lane tile
KERNEL_SIZES = (1, 2, 3)


def _round_up(x, m):
    return (x + m - 1) // m * m


def _make_kernel(TB, S, ksizes, col_offsets, OUTP):
    ncv = len(ksizes)

    def kernel(emb_ref, wall_ref, *refs):
        bias_refs = refs[:ncv]
        wl_refs = refs[ncv:2 * ncv]
        bl_ref = refs[2 * ncv]
        out_ref = refs[2 * ncv + 1]

        # One big MXU matmul: all shifted (D, 128) filter slabs at once.
        p = jnp.dot(emb_ref[...], wall_ref[...],
                    preferred_element_type=jnp.float32)        # (TB*S, Ctot) f32
        p3 = p.reshape(TB, S, p.shape[1])                      # (TB, S, Ctot)

        acc = jnp.zeros((TB, OUTP), jnp.float32)
        for idx in range(ncv):
            n = ksizes[idx]
            off = col_offsets[idx]
            L = S - n + 1
            # Combine the n shifted partial-product slabs (VPU adds).
            conv = p3[:, 0:L, off:off + F_PAD]
            for i in range(1, n):
                conv = conv + p3[:, i:i + L,
                                 off + i * F_PAD:off + (i + 1) * F_PAD]
            # Bias + ReLU (f32 VPU epilogue), then max-pool over time.
            conv = jnp.maximum(conv + bias_refs[idx][...].reshape(1, 1, F_PAD),
                               0.0)
            pooled = jnp.max(conv, axis=1)                     # (TB, 128)
            # Partial linear layer: this conv's pooled block maps to its
            # (pre-summed, padded) 128-row slice of the linear weight.
            acc = acc + jnp.dot(pooled, wl_refs[idx][...],
                                preferred_element_type=jnp.float32)
        out_ref[...] = acc + bl_ref[...]

    return kernel


def textcnn_forward(x, params, *, batch_tile=None):
    """x: (seq_len, batch) int32 token ids. Returns (batch, out_channels) f32."""
    emb_table = params["embedding"]
    S, B = x.shape
    D = emb_table.shape[1]
    out_channels = params["linear_b"].shape[0]
    OUTP = _round_up(out_channels, 128)

    # Embedding lookup (gather) — plain JAX glue; padding_idx row is zero in
    # the table.  Activations cast to bf16 for the MXU (accumulation stays f32).
    # TODO(synk): fuse the gather into the kernel (scalar-prefetch ids + row
    # DMAs from an HBM-resident table) to avoid materializing (B, S, D) in HBM.
    embedded = jnp.take(emb_table, x.T, axis=0).astype(jnp.bfloat16)  # (B,S,D)

    # Batch tile: multiple of 8 sublanes, large enough that the conv matmul has
    # a respectable M = TB*S.  Blocks here are tiny, so this fits comfortably
    # in the VMEM budget of v5e/v6e (128 MiB) and v7x (64 MiB) alike; the grid
    # axis stays "parallel" so v7x's two TensorCores split the batch tiles.
    if batch_tile is None:
        batch_tile = min(_round_up(B, 8), 32)
    TB = batch_tile
    B_pad = _round_up(B, TB)
    if B_pad != B:
        embedded = jnp.pad(embedded, ((0, B_pad - B), (0, 0), (0, 0)))
    emb2d = embedded.reshape(B_pad * S, D)

    # PyTorch skips convs whose kernel height exceeds seq_len and duplicates
    # the last surviving conv.  Dedupe duplicates by pre-summing the
    # corresponding 100-column slices of the linear weight (compute once).
    active = [k for k, n in enumerate(KERNEL_SIZES) if S >= n]
    slots = active + [active[-1]] * (3 - len(active))
    uniq = sorted(set(slots))

    wl = params["linear_w"]                                    # (out, 300)
    w_cols, bias_args, wl_args = [], [], []
    ksizes, col_offsets = [], []
    col = 0
    for c in uniq:
        w = params["conv_w"][c]                                # (100, n, D)
        n = w.shape[1]
        ksizes.append(n)
        col_offsets.append(col)
        for i in range(n):
            wi = jnp.transpose(w[:, i, :])                     # (D, 100)
            w_cols.append(jnp.pad(wi, ((0, 0), (0, F_PAD - NUM_FILTERS))))
            col += F_PAD
        b_c = jnp.pad(params["conv_b"][c], (0, F_PAD - NUM_FILTERS))
        bias_args.append(b_c.reshape(1, F_PAD).astype(jnp.float32))
        wl_c = None
        for s in range(3):
            if slots[s] != c:
                continue
            piece = wl[:, s * NUM_FILTERS:(s + 1) * NUM_FILTERS]
            wl_c = piece if wl_c is None else wl_c + piece
        wl_c = jnp.pad(jnp.transpose(wl_c),                    # (100, out)
                       ((0, F_PAD - NUM_FILTERS), (0, OUTP - out_channels)))
        wl_args.append(wl_c.astype(jnp.float32))

    w_all = jnp.concatenate(w_cols, axis=1).astype(jnp.bfloat16)   # (D, Ctot)
    ctot = col
    bl_pad = jnp.pad(params["linear_b"], (0, OUTP - out_channels))
    bl_pad = bl_pad.reshape(1, OUTP).astype(jnp.float32)

    kernel_args = [emb2d, w_all] + bias_args + wl_args + [bl_pad]
    in_specs = ([pl.BlockSpec((TB * S, D), lambda b: (b, 0)),
                 pl.BlockSpec((D, ctot), lambda b: (0, 0))]
                + [pl.BlockSpec((1, F_PAD), lambda b: (0, 0))
                   for _ in bias_args]
                + [pl.BlockSpec((F_PAD, OUTP), lambda b: (0, 0))
                   for _ in wl_args]
                + [pl.BlockSpec((1, OUTP), lambda b: (0, 0))])

    # TODO(synk): dropout(p=0.5) is identity in eval mode; training-mode
    # masking is not implemented.
    out = pl.pallas_call(
        _make_kernel(TB, S, tuple(ksizes), tuple(col_offsets), OUTP),
        out_shape=jax.ShapeDtypeStruct((B_pad, OUTP), jnp.float32),
        grid_spec=pltpu.PrefetchScalarGridSpec(
            num_scalar_prefetch=0,
            grid=(B_pad // TB,),
            in_specs=in_specs,
            out_specs=pl.BlockSpec((TB, OUTP), lambda b: (b, 0)),
        ),
        compiler_params=pltpu.CompilerParams(
            dimension_semantics=("parallel",)),
    )(*kernel_args)
    return out[:B, :out_channels]


def init_params(key, vocab_size, embedding_dim, out_channels):
    keys = jax.random.split(key, 9)
    emb = 0.1 * jax.random.normal(keys[0], (vocab_size, embedding_dim), jnp.float32)
    emb = emb.at[1].set(0.0)                                   # padding_idx=1 -> zero row
    conv_w, conv_b = [], []
    for i, n in enumerate(KERNEL_SIZES):
        conv_w.append(0.1 * jax.random.normal(keys[1 + i],
                                              (NUM_FILTERS, n, embedding_dim),
                                              jnp.float32))
        conv_b.append(0.1 * jax.random.normal(keys[4 + i], (NUM_FILTERS,), jnp.float32))
    lw = 0.1 * jax.random.normal(keys[7], (out_channels, 3 * NUM_FILTERS), jnp.float32)
    lb = 0.1 * jax.random.normal(keys[8], (out_channels,), jnp.float32)
    return dict(embedding=emb, conv_w=conv_w, conv_b=conv_b, linear_w=lw, linear_b=lb)


def reference_forward(x, params):
    """Pure-JAX f32 reference mirroring the PyTorch forward (eval mode)."""
    emb = jnp.take(params["embedding"], x.T, axis=0)           # (B, S, D)
    S = emb.shape[1]
    pooled = []
    for k, n in enumerate(KERNEL_SIZES):
        if S < n:
            continue
        L = S - n + 1
        windows = jnp.stack([emb[:, i:i + L, :] for i in range(n)], axis=2)  # (B,L,n,D)
        conv = jnp.einsum("blnd,cnd->blc", windows, params["conv_w"][k]) + params["conv_b"][k]
        conv = jnp.maximum(conv, 0.0)
        pooled.append(conv.max(axis=1))                        # (B, 100)
    pooled.extend([pooled[-1]] * (3 - len(pooled)))
    feat = jnp.concatenate(pooled, axis=1)                     # (B, 300)
    return feat @ params["linear_w"].T + params["linear_b"]


if __name__ == "__main__":
    vocab_size, embedding_dim, out_channels = 20, 32, 8
    seq_len, batch = 8, 2

    key = jax.random.PRNGKey(0)
    pkey, xkey = jax.random.split(key)
    params = init_params(pkey, vocab_size, embedding_dim, out_channels)
    x = jax.random.randint(xkey, (seq_len, batch), 0, vocab_size, dtype=jnp.int32)

    out = textcnn_forward(x, params)
    jax.block_until_ready(out)

    ref = reference_forward(x, params)
    # bf16 activations/conv weights -> loosened tolerance vs. the f32 reference.
    np.testing.assert_allclose(np.asarray(out), np.asarray(ref), rtol=2e-2, atol=1e-2)

    print("KERNEL_OK")
</pallas_src>

<mosaic_0001>
module attributes {stable_mosaic.version = 11 : i64} {
  func.func @kernel(%arg0: i32, %arg1: memref<64x32xbf16, #tpu.memory_space<vmem>>, %arg2: memref<32x768xbf16, #tpu.memory_space<vmem>>, %arg3: memref<1x128xf32, #tpu.memory_space<vmem>>, %arg4: memref<1x128xf32, #tpu.memory_space<vmem>>, %arg5: memref<1x128xf32, #tpu.memory_space<vmem>>, %arg6: memref<128x128xf32, #tpu.memory_space<vmem>>, %arg7: memref<128x128xf32, #tpu.memory_space<vmem>>, %arg8: memref<128x128xf32, #tpu.memory_space<vmem>>, %arg9: memref<1x128xf32, #tpu.memory_space<vmem>>, %arg10: memref<8x128xf32, #tpu.memory_space<vmem>>) attributes {dimension_semantics = [#tpu.dimension_semantics<parallel>], iteration_bounds = array<i64: 1>, scalar_prefetch = 0 : i64, scratch_operands = 0 : i64, tpu.core_type = #tpu.core_type<tc>, window_params = [{transform_indices = @transform_0, window_bounds = array<i64: 64, 32>}, {pipeline_mode = #tpu.pipeline_mode<synchronous>, transform_indices = @transform_1, window_bounds = array<i64: 32, 768>}, {pipeline_mode = #tpu.pipeline_mode<synchronous>, transform_indices = @transform_2, window_bounds = array<i64: 1, 128>}, {pipeline_mode = #tpu.pipeline_mode<synchronous>, transform_indices = @transform_3, window_bounds = array<i64: 1, 128>}, {pipeline_mode = #tpu.pipeline_mode<synchronous>, transform_indices = @transform_4, window_bounds = array<i64: 1, 128>}, {pipeline_mode = #tpu.pipeline_mode<synchronous>, transform_indices = @transform_5, window_bounds = array<i64: 128, 128>}, {pipeline_mode = #tpu.pipeline_mode<synchronous>, transform_indices = @transform_6, window_bounds = array<i64: 128, 128>}, {pipeline_mode = #tpu.pipeline_mode<synchronous>, transform_indices = @transform_7, window_bounds = array<i64: 128, 128>}, {pipeline_mode = #tpu.pipeline_mode<synchronous>, transform_indices = @transform_8, window_bounds = array<i64: 1, 128>}, {transform_indices = @transform_9, window_bounds = array<i64: 8, 128>}]} {
    %c0 = arith.constant 0 : index
    %c0_0 = arith.constant 0 : index
    %0 = vector.load %arg1[%c0, %c0_0] : memref<64x32xbf16, #tpu.memory_space<vmem>>, vector<64x32xbf16>
    %c0_1 = arith.constant 0 : index
    %c0_2 = arith.constant 0 : index
    %1 = vector.load %arg2[%c0_1, %c0_2] : memref<32x768xbf16, #tpu.memory_space<vmem>>, vector<32x768xbf16>
    %cst = arith.constant dense<0.000000e+00> : vector<64x768xf32>
    %2 = tpu.matmul %0, %1, %cst {dimension_numbers = #tpu.dot_dimension_numbers<[1], [0], [0], [1], [0, 0, 1, 1], [], []>} : vector<64x32xbf16>, vector<32x768xbf16>, vector<64x768xf32> -> vector<64x768xf32>
    %3 = vector.shape_cast %2 : vector<64x768xf32> to vector<8x8x768xf32>
    %cst_3 = arith.constant 0.000000e+00 : f32
    %4 = vector.broadcast %cst_3 : f32 to vector<8x128xf32>
    %5 = vector.extract_strided_slice %3 {offsets = [0, 0, 0], sizes = [8, 8, 128], strides = [1, 1, 1]} : vector<8x8x768xf32> to vector<8x8x128xf32>
    %c0_4 = arith.constant 0 : index
    %c0_5 = arith.constant 0 : index
    %6 = vector.load %arg3[%c0_4, %c0_5] : memref<1x128xf32, #tpu.memory_space<vmem>>, vector<1x128xf32>
    %7 = vector.shape_cast %6 : vector<1x128xf32> to vector<1x1x128xf32>
    %8 = vector.broadcast %7 : vector<1x1x128xf32> to vector<8x8x128xf32>
    %9 = arith.addf %5, %8 : vector<8x8x128xf32>
    %cst_6 = arith.constant 0.000000e+00 : f32
    %10 = vector.broadcast %cst_6 : f32 to vector<8x8x128xf32>
    %11 = arith.maximumf %9, %10 : vector<8x8x128xf32>
    %cst_7 = arith.constant dense<0xFF800000> : vector<8x128xf32>
    %12 = vector.multi_reduction <maximumf>, %11, %cst_7 [1] : vector<8x8x128xf32> to vector<8x128xf32>
    %c0_8 = arith.constant 0 : index
    %c0_9 = arith.constant 0 : index
    %13 = vector.load %arg6[%c0_8, %c0_9] : memref<128x128xf32, #tpu.memory_space<vmem>>, vector<128x128xf32>
    %cst_10 = arith.constant dense<0.000000e+00> : vector<8x128xf32>
    %14 = tpu.matmul %12, %13, %cst_10 {dimension_numbers = #tpu.dot_dimension_numbers<[1], [0], [0], [1], [0, 0, 1, 1], [], []>} : vector<8x128xf32>, vector<128x128xf32>, vector<8x128xf32> -> vector<8x128xf32>
    %15 = arith.addf %4, %14 : vector<8x128xf32>
    %16 = vector.extract_strided_slice %3 {offsets = [0, 0, 128], sizes = [8, 7, 128], strides = [1, 1, 1]} : vector<8x8x768xf32> to vector<8x7x128xf32>
    %17 = vector.extract_strided_slice %3 {offsets = [0, 1, 256], sizes = [8, 7, 128], strides = [1, 1, 1]} : vector<8x8x768xf32> to vector<8x7x128xf32>
    %18 = arith.addf %16, %17 : vector<8x7x128xf32>
    %c0_11 = arith.constant 0 : index
    %c0_12 = arith.constant 0 : index
    %19 = vector.load %arg4[%c0_11, %c0_12] : memref<1x128xf32, #tpu.memory_space<vmem>>, vector<1x128xf32>
    %20 = vector.shape_cast %19 : vector<1x128xf32> to vector<1x1x128xf32>
    %21 = vector.broadcast %20 : vector<1x1x128xf32> to vector<8x7x128xf32>
    %22 = arith.addf %18, %21 : vector<8x7x128xf32>
    %cst_13 = arith.constant 0.000000e+00 : f32
    %23 = vector.broadcast %cst_13 : f32 to vector<8x7x128xf32>
    %24 = arith.maximumf %22, %23 : vector<8x7x128xf32>
    %cst_14 = arith.constant dense<0xFF800000> : vector<8x128xf32>
    %25 = vector.multi_reduction <maximumf>, %24, %cst_14 [1] : vector<8x7x128xf32> to vector<8x128xf32>
    %c0_15 = arith.constant 0 : index
    %c0_16 = arith.constant 0 : index
    %26 = vector.load %arg7[%c0_15, %c0_16] : memref<128x128xf32, #tpu.memory_space<vmem>>, vector<128x128xf32>
    %cst_17 = arith.constant dense<0.000000e+00> : vector<8x128xf32>
    %27 = tpu.matmul %25, %26, %cst_17 {dimension_numbers = #tpu.dot_dimension_numbers<[1], [0], [0], [1], [0, 0, 1, 1], [], []>} : vector<8x128xf32>, vector<128x128xf32>, vector<8x128xf32> -> vector<8x128xf32>
    %28 = arith.addf %15, %27 : vector<8x128xf32>
    %29 = vector.extract_strided_slice %3 {offsets = [0, 0, 384], sizes = [8, 6, 128], strides = [1, 1, 1]} : vector<8x8x768xf32> to vector<8x6x128xf32>
    %30 = vector.extract_strided_slice %3 {offsets = [0, 1, 512], sizes = [8, 6, 128], strides = [1, 1, 1]} : vector<8x8x768xf32> to vector<8x6x128xf32>
    %31 = arith.addf %29, %30 : vector<8x6x128xf32>
    %32 = vector.extract_strided_slice %3 {offsets = [0, 2, 640], sizes = [8, 6, 128], strides = [1, 1, 1]} : vector<8x8x768xf32> to vector<8x6x128xf32>
    %33 = arith.addf %31, %32 : vector<8x6x128xf32>
    %c0_18 = arith.constant 0 : index
    %c0_19 = arith.constant 0 : index
    %34 = vector.load %arg5[%c0_18, %c0_19] : memref<1x128xf32, #tpu.memory_space<vmem>>, vector<1x128xf32>
    %35 = vector.shape_cast %34 : vector<1x128xf32> to vector<1x1x128xf32>
    %36 = vector.broadcast %35 : vector<1x1x128xf32> to vector<8x6x128xf32>
    %37 = arith.addf %33, %36 : vector<8x6x128xf32>
    %cst_20 = arith.constant 0.000000e+00 : f32
    %38 = vector.broadcast %cst_20 : f32 to vector<8x6x128xf32>
    %39 = arith.maximumf %37, %38 : vector<8x6x128xf32>
    %cst_21 = arith.constant dense<0xFF800000> : vector<8x128xf32>
    %40 = vector.multi_reduction <maximumf>, %39, %cst_21 [1] : vector<8x6x128xf32> to vector<8x128xf32>
    %c0_22 = arith.constant 0 : index
    %c0_23 = arith.constant 0 : index
    %41 = vector.load %arg8[%c0_22, %c0_23] : memref<128x128xf32, #tpu.memory_space<vmem>>, vector<128x128xf32>
    %cst_24 = arith.constant dense<0.000000e+00> : vector<8x128xf32>
    %42 = tpu.matmul %40, %41, %cst_24 {dimension_numbers = #tpu.dot_dimension_numbers<[1], [0], [0], [1], [0, 0, 1, 1], [], []>} : vector<8x128xf32>, vector<128x128xf32>, vector<8x128xf32> -> vector<8x128xf32>
    %43 = arith.addf %28, %42 : vector<8x128xf32>
    %c0_25 = arith.constant 0 : index
    %c0_26 = arith.constant 0 : index
    %44 = vector.load %arg9[%c0_25, %c0_26] : memref<1x128xf32, #tpu.memory_space<vmem>>, vector<1x128xf32>
    %45 = vector.broadcast %44 : vector<1x128xf32> to vector<8x128xf32>
    %46 = arith.addf %43, %45 : vector<8x128xf32>
    %c0_27 = arith.constant 0 : index
    %c0_28 = arith.constant 0 : index
    %47 = vector.load %arg10[%c0_27, %c0_28] : memref<8x128xf32, #tpu.memory_space<vmem>>, vector<8x128xf32>
    tpu.vector_store %arg10[%c0_27, %c0_28], %46 {strides = array<i32>} : memref<8x128xf32, #tpu.memory_space<vmem>>, vector<8x128xf32>,
    return
  }
  func.func @transform_0(%arg0: i32) -> (i32, i32) {
    %c0_i32 = arith.constant 0 : i32
    %c0_i32_0 = arith.constant 0 : i32
    return %arg0, %c0_i32 : i32, i32
  }
  func.func @transform_1(%arg0: i32) -> (i32, i32) {
    %c0_i32 = arith.constant 0 : i32
    %c0_i32_0 = arith.constant 0 : i32
    %c0_i32_1 = arith.constant 0 : i32
    return %c0_i32, %c0_i32_0 : i32, i32
  }
  func.func @transform_2(%arg0: i32) -> (i32, i32) {
    %c0_i32 = arith.constant 0 : i32
    %c0_i32_0 = arith.constant 0 : i32
    %c0_i32_1 = arith.constant 0 : i32
    return %c0_i32, %c0_i32_0 : i32, i32
  }
  func.func @transform_3(%arg0: i32) -> (i32, i32) {
    %c0_i32 = arith.constant 0 : i32
    %c0_i32_0 = arith.constant 0 : i32
    %c0_i32_1 = arith.constant 0 : i32
    return %c0_i32, %c0_i32_0 : i32, i32
  }
  func.func @transform_4(%arg0: i32) -> (i32, i32) {
    %c0_i32 = arith.constant 0 : i32
    %c0_i32_0 = arith.constant 0 : i32
    %c0_i32_1 = arith.constant 0 : i32
    return %c0_i32, %c0_i32_0 : i32, i32
  }
  func.func @transform_5(%arg0: i32) -> (i32, i32) {
    %c0_i32 = arith.constant 0 : i32
    %c0_i32_0 = arith.constant 0 : i32
    %c0_i32_1 = arith.constant 0 : i32
    return %c0_i32, %c0_i32_0 : i32, i32
  }
  func.func @transform_6(%arg0: i32) -> (i32, i32) {
    %c0_i32 = arith.constant 0 : i32
    %c0_i32_0 = arith.constant 0 : i32
    %c0_i32_1 = arith.constant 0 : i32
    return %c0_i32, %c0_i32_0 : i32, i32
  }
  func.func @transform_7(%arg0: i32) -> (i32, i32) {
    %c0_i32 = arith.constant 0 : i32
    %c0_i32_0 = arith.constant 0 : i32
    %c0_i32_1 = arith.constant 0 : i32
    return %c0_i32, %c0_i32_0 : i32, i32
  }
  func.func @transform_8(%arg0: i32) -> (i32, i32) {
    %c0_i32 = arith.constant 0 : i32
    %c0_i32_0 = arith.constant 0 : i32
    %c0_i32_1 = arith.constant 0 : i32
    return %c0_i32, %c0_i32_0 : i32, i32
  }
  func.func @transform_9(%arg0: i32) -> (i32, i32) {
    %c0_i32 = arith.constant 0 : i32
    %c0_i32_0 = arith.constant 0 : i32
    return %arg0, %c0_i32 : i32, i32
  }
}

</mosaic_0001>

<llo_original>
// kernel: tpu_custom_call.1
$region0: #{tpu_custom_call.1}
  #allocation0 [shape = 'u32[]', space=smem, size = 0x4, offset = 0x4, fixed_abs, tag = 'smem constant byte address 0x4 - core index']
  #allocation1 [shape = 'u32[144,128]{1,0:T(1,128)}', space=vmem, size = 0x12000, scoped, tag = 'internal scratch']
  %s0 = inlined_call_operand.vmem [shape: bf16[64,32], index: 0, kind: input, shape index: {}]
  %s1 = inlined_call_operand.hbm [shape: bf16[32,768], index: 1, kind: input, shape index: {}]
  %s2 = inlined_call_operand.vmem [shape: f32[1,128], index: 2, kind: input, shape index: {}]
  %s3 = inlined_call_operand.vmem [shape: f32[1,128], index: 3, kind: input, shape index: {}]
  %s4 = inlined_call_operand.vmem [shape: f32[1,128], index: 4, kind: input, shape index: {}]
  %s5 = inlined_call_operand.hbm [shape: f32[128,128], index: 5, kind: input, shape index: {}]
  %s6 = inlined_call_operand.hbm [shape: f32[128,128], index: 6, kind: input, shape index: {}]
  %s7 = inlined_call_operand.hbm [shape: f32[128,128], index: 7, kind: input, shape index: {}]
  %s8 = inlined_call_operand.vmem [shape: f32[1,128], index: 8, kind: input, shape index: {}]
  %s9 = inlined_call_operand.hbm [shape: f32[8,128], index: 9, kind: output, shape index: {}]
  %s10 = sld [smem:[#allocation0]]
  $region62: #{tpu_custom_call.1} parent=0
    _
  %s12 = ssub.s32 1, %s10
  %s13 = scalar_select 0, %s12, %s10
  $region1: #{tpu_custom_call.1} parent=0
    #allocation2 [shape = 'u8[49152]{0}', space=vmem, size = 0xc000, scoped, tag = 'input window, operand 1, single buffered']
    #allocation3 [shape = 's32[1]{0}', space=sflag, size = 0x4, scoped, tag = 'scoped memory for tpu_custom_call.1']
    #allocation4 [shape = 's32[1]{0}', space=sflag, size = 0x4, scoped, tag = 'scoped memory for tpu_custom_call.1']
    #allocation5 [shape = 'u8[65536]{0}', space=vmem, size = 0x10000, scoped, tag = 'input window, operand 5, single buffered']
    #allocation6 [shape = 's32[1]{0}', space=sflag, size = 0x4, scoped, tag = 'scoped memory for tpu_custom_call.1']
    #allocation7 [shape = 'u8[65536]{0}', space=vmem, size = 0x10000, scoped, tag = 'input window, operand 6, single buffered']
    #allocation8 [shape = 'u8[65536]{0}', space=vmem, size = 0x10000, scoped, tag = 'input window, operand 7, single buffered']
    #allocation9 [shape = 's32[1]{0}', space=sflag, size = 0x4, scoped, tag = 'scoped memory for tpu_custom_call.1']
    #allocation10 [shape = 'u8[4096]{0}', space=vmem, size = 0x1000, scoped, tag = 'output window, operand 0, single buffered']
    %14 = vsyncpa [#allocation3], 0
    %15 = vsyncpa [#allocation6], 0
    %16 = vsyncpa [#allocation9], 0
    %17 = vsyncpa [#allocation4], 0
    // Predicated region
    $region2: #{tpu_custom_call.1} parent=1 // pred_check
      _
    $region3: #{tpu_custom_call.1} parent=1 // pred_check_branch
      %19 = sbr.rel (0) target = $region5
    $region4: #{tpu_custom_call.1} parent=1 // pred_region
      _
    $region5: #{tpu_custom_call.1} parent=1 // pred_fallthru
      _
    // Predicated region
    $region6: #{tpu_custom_call.1} parent=1 // pred_check
      _
    $region7: #{tpu_custom_call.1} parent=1 // pred_check_branch
      %21 = sbr.rel (0) target = $region9
    $region8: #{tpu_custom_call.1} parent=1 // pred_region
      %s23 = ssub.s32 1536, 1536
      %24 = vsyncadd [#allocation3], %s23
      %s25 = sshll.u32 [#allocation2], 4
      %s26 = int_to_ptr.vmem [resolvable:$true] %s25
      %31 = dma.hbm_to_vmem [thread:$0]  %s1, 1536, %s26, [#allocation3], 384, 384, 24
    $region9: #{tpu_custom_call.1} parent=1 // pred_fallthru
      _
    // Predicated region
    $region10: #{tpu_custom_call.1} parent=1 // pred_check
      _
    $region11: #{tpu_custom_call.1} parent=1 // pred_check_branch
      %33 = sbr.rel (0) target = $region13
    $region12: #{tpu_custom_call.1} parent=1 // pred_region
      _
    $region13: #{tpu_custom_call.1} parent=1 // pred_fallthru
      _
    // Predicated region
    $region14: #{tpu_custom_call.1} parent=1 // pred_check
      _
    $region15: #{tpu_custom_call.1} parent=1 // pred_check_branch
      %35 = sbr.rel (0) target = $region17
    $region16: #{tpu_custom_call.1} parent=1 // pred_region
      _
    $region17: #{tpu_custom_call.1} parent=1 // pred_fallthru
      _
    // Predicated region
    $region18: #{tpu_custom_call.1} parent=1 // pred_check
      _
    $region19: #{tpu_custom_call.1} parent=1 // pred_check_branch
      %37 = sbr.rel (0) target = $region21
    $region20: #{tpu_custom_call.1} parent=1 // pred_region
      _
    $region21: #{tpu_custom_call.1} parent=1 // pred_fallthru
      _
    // Predicated region
    $region22: #{tpu_custom_call.1} parent=1 // pred_check
      _
    $region23: #{tpu_custom_call.1} parent=1 // pred_check_branch
      %39 = sbr.rel (0) target = $region25
    $region24: #{tpu_custom_call.1} parent=1 // pred_region
      %s41 = ssub.s32 2048, 2048
      %42 = vsyncadd [#allocation6], %s41
      %s43 = sshll.u32 [#allocation5], 4
      %s44 = int_to_ptr.vmem [resolvable:$true] %s43
      %49 = dma.hbm_to_vmem [thread:$0]  %s5, 2048, %s44, [#allocation6], 128, 128, 8
    $region25: #{tpu_custom_call.1} parent=1 // pred_fallthru
      _
    // Predicated region
    $region26: #{tpu_custom_call.1} parent=1 // pred_check
      _
    $region27: #{tpu_custom_call.1} parent=1 // pred_check_branch
      %51 = sbr.rel (0) target = $region29
    $region28: #{tpu_custom_call.1} parent=1 // pred_region
      %s53 = ssub.s32 2048, 2048
      %54 = vsyncadd [#allocation6], %s53
      %s55 = sshll.u32 [#allocation7], 4
      %s56 = int_to_ptr.vmem [resolvable:$true] %s55
      %61 = dma.hbm_to_vmem [thread:$0]  %s6, 2048, %s56, [#allocation6], 128, 128, 8
    $region29: #{tpu_custom_call.1} parent=1 // pred_fallthru
      _
    // Predicated region
    $region30: #{tpu_custom_call.1} parent=1 // pred_check
      _
    $region31: #{tpu_custom_call.1} parent=1 // pred_check_branch
      %63 = sbr.rel (0) target = $region33
    $region32: #{tpu_custom_call.1} parent=1 // pred_region
      %s65 = ssub.s32 2048, 2048
      %66 = vsyncadd [#allocation9], %s65
      %s67 = sshll.u32 [#allocation8], 4
      %s68 = int_to_ptr.vmem [resolvable:$true] %s67
      %73 = dma.hbm_to_vmem [thread:$0]  %s7, 2048, %s68, [#allocation9], 128, 128, 8
    $region33: #{tpu_custom_call.1} parent=1 // pred_fallthru
      _
    // Predicated region
    $region34: #{tpu_custom_call.1} parent=1 // pred_check
      _
    $region35: #{tpu_custom_call.1} parent=1 // pred_check_branch
      %75 = sbr.rel (0) target = $region37
    $region36: #{tpu_custom_call.1} parent=1 // pred_region
      _
    $region37: #{tpu_custom_call.1} parent=1 // pred_fallthru
      _
    // Predicated region
    $region38: #{tpu_custom_call.1} parent=1 // pred_check
      _
    $region39: #{tpu_custom_call.1} parent=1 // pred_check_branch
      %77 = sbr.rel (0) target = $region41
    $region40: #{tpu_custom_call.1} parent=1 // pred_region
      %78 = dma.done [#allocation3], 1536
    $region41: #{tpu_custom_call.1} parent=1 // pred_fallthru
      _
    // Predicated region
    $region42: #{tpu_custom_call.1} parent=1 // pred_check
      _
    $region43: #{tpu_custom_call.1} parent=1 // pred_check_branch
      %80 = sbr.rel (0) target = $region45
    $region44: #{tpu_custom_call.1} parent=1 // pred_region
      %81 = dma.done [#allocation6], 2048
    $region45: #{tpu_custom_call.1} parent=1 // pred_fallthru
      _
    // Predicated region
    $region46: #{tpu_custom_call.1} parent=1 // pred_check
      _
    $region47: #{tpu_custom_call.1} parent=1 // pred_check_branch
      %83 = sbr.rel (0) target = $region49
    $region48: #{tpu_custom_call.1} parent=1 // pred_region
      %84 = dma.done [#allocation6], 2048
    $region49: #{tpu_custom_call.1} parent=1 // pred_fallthru
      _
    // Predicated region
    $region50: #{tpu_custom_call.1} parent=1 // pred_check
      _
    $region51: #{tpu_custom_call.1} parent=1 // pred_check_branch
      %86 = sbr.rel (0) target = $region53
    $region52: #{tpu_custom_call.1} parent=1 // pred_region
      %87 = dma.done [#allocation9], 2048
    $region53: #{tpu_custom_call.1} parent=1 // pred_fallthru
      _
    %v89 = vld [vmem:[%s0] sm:$0xf]
    %v90 = vld [vmem:[%s0 + $0x4] sm:$0xf]
    %v91 = vld [vmem:[%s0 + $0x8] sm:$0xf]
    %v92 = vld [vmem:[%s0 + $0xc] sm:$0xf]
    %v93 = vld [vmem:[%s0 + $0x10] sm:$0xf]
    %v94 = vld [vmem:[%s0 + $0x14] sm:$0xf]
    %v95 = vld [vmem:[%s0 + $0x18] sm:$0xf]
    %v96 = vld [vmem:[%s0 + $0x1c] sm:$0xf]
    %v97 = vld [vmem:[#allocation2] sm:$0xff]
    %v98 = vld [vmem:[#allocation2 + $0x8] sm:$0xff]
    %v99 = vld [vmem:[#allocation2 + $0x10] sm:$0xff]
    %v100 = vld [vmem:[#allocation2 + $0x18] sm:$0xff]
    %v101 = vld [vmem:[#allocation2 + $0x20] sm:$0xff]
    %v102 = vld [vmem:[#allocation2 + $0x28] sm:$0xff]
    %v103 = vld [vmem:[#allocation2 + $0x30] sm:$0xff]
    %v104 = vld [vmem:[#allocation2 + $0x38] sm:$0xff]
    %v105 = vld [vmem:[#allocation2 + $0x40] sm:$0xff]
    %v106 = vld [vmem:[#allocation2 + $0x48] sm:$0xff]
    %v107 = vld [vmem:[#allocation2 + $0x50] sm:$0xff]
    %v108 = vld [vmem:[#allocation2 + $0x58] sm:$0xff]
    %v117 = vunpack.c.l.b16 %v89
    %v118 = vunpack.c.l.b16 %v90
    %v119 = vunpack.c.l.b16 %v91
    %v120 = vunpack.c.l.b16 %v92
    %v121 = vunpack.c.l.b16 %v93
    %v122 = vunpack.c.l.b16 %v94
    %v123 = vunpack.c.l.b16 %v95
    %v124 = vunpack.c.l.b16 %v96
    %v125 = vpack.c.b16 %v118, %v117
    %v126 = vpack.c.b16 %v120, %v119
    %v127 = vpack.c.b16 %v122, %v121
    %v128 = vpack.c.b16 %v124, %v123
    %v141 = vunpack.c.l.b16 %v97
    %v142 = vunpack.c.h.b16 %v97
    %v143 = vunpack.c.l.b16 %v98
    %v144 = vunpack.c.h.b16 %v98
    %v145 = vunpack.c.l.b16 %v99
    %v146 = vunpack.c.h.b16 %v99
    %v147 = vunpack.c.l.b16 %v100
    %v148 = vunpack.c.h.b16 %v100
    %v149 = vunpack.c.l.b16 %v101
    %v150 = vunpack.c.h.b16 %v101
    %v151 = vunpack.c.l.b16 %v102
    %v152 = vunpack.c.h.b16 %v102
    %v153 = vunpack.c.l.b16 %v103
    %v154 = vunpack.c.h.b16 %v103
    %v155 = vunpack.c.l.b16 %v104
    %v156 = vunpack.c.h.b16 %v104
    %v157 = vunpack.c.l.b16 %v105
    %v158 = vunpack.c.h.b16 %v105
    %v159 = vunpack.c.l.b16 %v106
    %v160 = vunpack.c.h.b16 %v106
    %v161 = vunpack.c.l.b16 %v107
    %v162 = vunpack.c.h.b16 %v107
    %v163 = vunpack.c.l.b16 %v108
    %v164 = vunpack.c.h.b16 %v108
    %v165 = vpack.c.b16 %v147, %v141
    %v166 = vpack.c.b16 %v148, %v142
    %v167 = vpack.c.b16 %v149, %v143
    %v168 = vpack.c.b16 %v150, %v144
    %v169 = vpack.c.b16 %v151, %v145
    %v170 = vpack.c.b16 %v152, %v146
    %v171 = vpack.c.b16 %v159, %v153
    %v172 = vpack.c.b16 %v160, %v154
    %v173 = vpack.c.b16 %v161, %v155
    %v174 = vpack.c.b16 %v162, %v156
    %v175 = vpack.c.b16 %v163, %v157
    %v176 = vpack.c.b16 %v164, %v158
    %vm189 = vcmask 261120
    %v191 = vsel %vm189, %v125, 0
    %v194 = vsel %vm189, %v126, 0
    %v197 = vsel %vm189, %v127, 0
    %v200 = vsel %vm189, %v128, 0
    %202 = vmatprep.subr.bf16.mxu0 %v166
    %203 = vmatpush1.bf16.msra.mxu0 %v165
    %204 = vmatprep.subr.bf16.mxu0 %v172
    %205 = vmatpush1.bf16.msra.mxu0 %v171
    %206 = vmatprep.subr.bf16.mxu0 0
    %207 = vmatpush1.bf16.msra.mxu0 0
    %208 = vmatprep.subr.bf16.mxu0 0
    %209 = vmatpush1.bf16.msra.mxu0 0
    %210 = vmatprep.subr.bf16.mxu0 0
    %211 = vmatpush1.bf16.msra.mxu0 0
    %212 = vmatprep.subr.bf16.mxu0 0
    %213 = vmatpush1.bf16.msra.mxu0 0
    %214 = vmatprep.subr.bf16.mxu0 0
    %215 = vmatpush1.bf16.msra.mxu0 0
    %216 = vmatprep.subr.bf16.mxu0 0
    %217 = vmatpush1.bf16.msra.mxu0 0
    %218 = vmatprep.subr.bf16.mxu0 0
    %219 = vmatpush1.bf16.msra.mxu0 0
    %220 = vmatprep.subr.bf16.mxu0 0
    %221 = vmatpush1.bf16.msra.mxu0 0
    %222 = vmatprep.subr.bf16.mxu0 0
    %223 = vmatpush1.bf16.msra.mxu0 0
    %224 = vmatprep.subr.bf16.mxu0 0
    %225 = vmatpush1.bf16.msra.mxu0 0
    %226 = vmatprep.subr.bf16.mxu0 0
    %227 = vmatpush1.bf16.msra.mxu0 0
    %228 = vmatprep.subr.bf16.mxu0 0
    %229 = vmatpush1.bf16.msra.mxu0 0
    %230 = vmatprep.subr.bf16.mxu0 0
    %231 = vmatpush1.bf16.msra.mxu0 0
    %232 = vmatprep.subr.bf16.mxu0 0
    %233 = vmatpush1.bf16.msra.mxu0 0
    %234 = vmatprep.mubr.bf16.mxu0 0
    %235 = vmatmul.mubr.bf16.gmra.mrb[0].mxu0 %v191
    %v236 = vpop.f32.mrb[0].mxu0
    %v237 = vadd.f32 0.0, %v236
    %v238 = vpop.f32.mrb[0].mxu0
    %v239 = vadd.f32 0.0, %v238
    %v240 = vpop.f32.mrb[0].mxu0
    %v241 = vadd.f32 0.0, %v240
    %v242 = vpop.f32.mrb[0].mxu0
    %v243 = vadd.f32 0.0, %v242
    %244 = vmatprep.mubr.bf16.mxu0 0
    %245 = vmatmul.mubr.bf16.gmra.mrb[0].mxu0 %v194
    %v246 = vpop.f32.mrb[0].mxu0
    %v247 = vadd.f32 0.0, %v246
    %v248 = vpop.f32.mrb[0].mxu0
    %v249 = vadd.f32 0.0, %v248
    %v250 = vpop.f32.mrb[0].mxu0
    %v251 = vadd.f32 0.0, %v250
    %v252 = vpop.f32.mrb[0].mxu0
    %v253 = vadd.f32 0.0, %v252
    %254 = vmatprep.mubr.bf16.mxu0 0
    %255 = vmatmul.mubr.bf16.gmra.mrb[0].mxu0 %v197
    %v256 = vpop.f32.mrb[0].mxu0
    %v257 = vadd.f32 0.0, %v256
    %v258 = vpop.f32.mrb[0].mxu0
    %v259 = vadd.f32 0.0, %v258
    %v260 = vpop.f32.mrb[0].mxu0
    %v261 = vadd.f32 0.0, %v260
    %v262 = vpop.f32.mrb[0].mxu0
    %v263 = vadd.f32 0.0, %v262
    %264 = vmatprep.mubr.bf16.mxu0 0
    %265 = vmatmul.mubr.bf16.gmra.mrb[0].mxu0 %v200
    %v266 = vpop.f32.mrb[0].mxu0
    %v267 = vadd.f32 0.0, %v266
    %v268 = vpop.f32.mrb[0].mxu0
    %v269 = vadd.f32 0.0, %v268
    %v270 = vpop.f32.mrb[0].mxu0
    %v271 = vadd.f32 0.0, %v270
    %v272 = vpop.f32.mrb[0].mxu0
    %v273 = vadd.f32 0.0, %v272
    %274 = vdwg.mxu0
    %275 = vmatprep.subr.bf16.mxu0 %v168
    %276 = vmatpush1.bf16.msra.mxu0 %v167
    %277 = vmatprep.subr.bf16.mxu0 %v174
    %278 = vmatpush1.bf16.msra.mxu0 %v173
    %279 = vmatprep.subr.bf16.mxu0 0
    %280 = vmatpush1.bf16.msra.mxu0 0
    %281 = vmatprep.subr.bf16.mxu0 0
    %282 = vmatpush1.bf16.msra.mxu0 0
    %283 = vmatprep.subr.bf16.mxu0 0
    %284 = vmatpush1.bf16.msra.mxu0 0
    %285 = vmatprep.subr.bf16.mxu0 0
    %286 = vmatpush1.bf16.msra.mxu0 0
    %287 = vmatprep.subr.bf16.mxu0 0
    %288 = vmatpush1.bf16.msra.mxu0 0
    %289 = vmatprep.subr.bf16.mxu0 0
    %290 = vmatpush1.bf16.msra.mxu0 0
    %291 = vmatprep.subr.bf16.mxu0 0
    %292 = vmatpush1.bf16.msra.mxu0 0
    %293 = vmatprep.subr.bf16.mxu0 0
    %294 = vmatpush1.bf16.msra.mxu0 0
    %295 = vmatprep.subr.bf16.mxu0 0
    %296 = vmatpush1.bf16.msra.mxu0 0
    %297 = vmatprep.subr.bf16.mxu0 0
    %298 = vmatpush1.bf16.msra.mxu0 0
    %299 = vmatprep.subr.bf16.mxu0 0
    %300 = vmatpush1.bf16.msra.mxu0 0
    %301 = vmatprep.subr.bf16.mxu0 0
    %302 = vmatpush1.bf16.msra.mxu0 0
    %303 = vmatprep.subr.bf16.mxu0 0
    %304 = vmatpush1.bf16.msra.mxu0 0
    %305 = vmatprep.subr.bf16.mxu0 0
    %306 = vmatpush1.bf16.msra.mxu0 0
    %307 = vmatprep.mubr.bf16.mxu0 0
    %308 = vmatmul.mubr.bf16.gmra.mrb[0].mxu0 %v191
    %v309 = vpop.f32.mrb[0].mxu0
    %v310 = vadd.f32 0.0, %v309
    %v311 = vpop.f32.mrb[0].mxu0
    %v312 = vadd.f32 0.0, %v311
    %v313 = vpop.f32.mrb[0].mxu0
    %v314 = vadd.f32 0.0, %v313
    %v315 = vpop.f32.mrb[0].mxu0
    %v316 = vadd.f32 0.0, %v315
    %317 = vmatprep.mubr.bf16.mxu0 0
    %318 = vmatmul.mubr.bf16.gmra.mrb[0].mxu0 %v194
    %v319 = vpop.f32.mrb[0].mxu0
    %v320 = vadd.f32 0.0, %v319
    %v321 = vpop.f32.mrb[0].mxu0
    %v322 = vadd.f32 0.0, %v321
    %v323 = vpop.f32.mrb[0].mxu0
    %v324 = vadd.f32 0.0, %v323
    %v325 = vpop.f32.mrb[0].mxu0
    %v326 = vadd.f32 0.0, %v325
    %327 = vmatprep.mubr.bf16.mxu0 0
    %328 = vmatmul.mubr.bf16.gmra.mrb[0].mxu0 %v197
    %v329 = vpop.f32.mrb[0].mxu0
    %v330 = vadd.f32 0.0, %v329
    %v331 = vpop.f32.mrb[0].mxu0
    %v332 = vadd.f32 0.0, %v331
    %v333 = vpop.f32.mrb[0].mxu0
    %v334 = vadd.f32 0.0, %v333
    %v335 = vpop.f32.mrb[0].mxu0
    %v336 = vadd.f32 0.0, %v335
    %337 = vmatprep.mubr.bf16.mxu0 0
    %338 = vmatmul.mubr.bf16.gmra.mrb[0].mxu0 %v200
    %v339 = vpop.f32.mrb[0].mxu0
    %v340 = vadd.f32 0.0, %v339
    %v341 = vpop.f32.mrb[0].mxu0
    %v342 = vadd.f32 0.0, %v341
    %v343 = vpop.f32.mrb[0].mxu0
    %v344 = vadd.f32 0.0, %v343
    %v345 = vpop.f32.mrb[0].mxu0
    %v346 = vadd.f32 0.0, %v345
    %347 = vdwg.mxu0
    %348 = vmatprep.subr.bf16.mxu0 %v170
    %349 = vmatpush1.bf16.msra.mxu0 %v169
    %350 = vmatprep.subr.bf16.mxu0 %v176
    %351 = vmatpush1.bf16.msra.mxu0 %v175
    %352 = vmatprep.subr.bf16.mxu0 0
    %353 = vmatpush1.bf16.msra.mxu0 0
    %354 = vmatprep.subr.bf16.mxu0 0
    %355 = vmatpush1.bf16.msra.mxu0 0
    %356 = vmatprep.subr.bf16.mxu0 0
    %357 = vmatpush1.bf16.msra.mxu0 0
    %358 = vmatprep.subr.bf16.mxu0 0
    %359 = vmatpush1.bf16.msra.mxu0 0
    %360 = vmatprep.subr.bf16.mxu0 0
    %361 = vmatpush1.bf16.msra.mxu0 0
    %362 = vmatprep.subr.bf16.mxu0 0
    %363 = vmatpush1.bf16.msra.mxu0 0
    %364 = vmatprep.subr.bf16.mxu0 0
    %365 = vmatpush1.bf16.msra.mxu0 0
    %366 = vmatprep.subr.bf16.mxu0 0
    %367 = vmatpush1.bf16.msra.mxu0 0
    %368 = vmatprep.subr.bf16.mxu0 0
    %369 = vmatpush1.bf16.msra.mxu0 0
    %370 = vmatprep.subr.bf16.mxu0 0
    %371 = vmatpush1.bf16.msra.mxu0 0
    %372 = vmatprep.subr.bf16.mxu0 0
    %373 = vmatpush1.bf16.msra.mxu0 0
    %374 = vmatprep.subr.bf16.mxu0 0
    %375 = vmatpush1.bf16.msra.mxu0 0
    %376 = vmatprep.subr.bf16.mxu0 0
    %377 = vmatpush1.bf16.msra.mxu0 0
    %378 = vmatprep.subr.bf16.mxu0 0
    %379 = vmatpush1.bf16.msra.mxu0 0
    %380 = vmatprep.mubr.bf16.mxu0 0
    %381 = vmatmul.mubr.bf16.gmra.mrb[0].mxu0 %v191
    %v382 = vpop.f32.mrb[0].mxu0
    %v383 = vadd.f32 0.0, %v382
    %v384 = vpop.f32.mrb[0].mxu0
    %v385 = vadd.f32 0.0, %v384
    %v386 = vpop.f32.mrb[0].mxu0
    %v387 = vadd.f32 0.0, %v386
    %v388 = vpop.f32.mrb[0].mxu0
    %v389 = vadd.f32 0.0, %v388
    %390 = vmatprep.mubr.bf16.mxu0 0
    %391 = vmatmul.mubr.bf16.gmra.mrb[0].mxu0 %v194
    %v392 = vpop.f32.mrb[0].mxu0
    %v393 = vadd.f32 0.0, %v392
    %v394 = vpop.f32.mrb[0].mxu0
    %v395 = vadd.f32 0.0, %v394
    %v396 = vpop.f32.mrb[0].mxu0
    %v397 = vadd.f32 0.0, %v396
    %v398 = vpop.f32.mrb[0].mxu0
    %v399 = vadd.f32 0.0, %v398
    %400 = vmatprep.mubr.bf16.mxu0 0
    %401 = vmatmul.mubr.bf16.gmra.mrb[0].mxu0 %v197
    %v402 = vpop.f32.mrb[0].mxu0
    %v403 = vadd.f32 0.0, %v402
    %v404 = vpop.f32.mrb[0].mxu0
    %v405 = vadd.f32 0.0, %v404
    %v406 = vpop.f32.mrb[0].mxu0
    %v407 = vadd.f32 0.0, %v406
    %v408 = vpop.f32.mrb[0].mxu0
    %v409 = vadd.f32 0.0, %v408
    %410 = vmatprep.mubr.bf16.mxu0 0
    %411 = vmatmul.mubr.bf16.gmra.mrb[0].mxu0 %v200
    %v412 = vpop.f32.mrb[0].mxu0
    %v413 = vadd.f32 0.0, %v412
    %v414 = vpop.f32.mrb[0].mxu0
    %v415 = vadd.f32 0.0, %v414
    %v416 = vpop.f32.mrb[0].mxu0
    %v417 = vadd.f32 0.0, %v416
    %v418 = vpop.f32.mrb[0].mxu0
    %v419 = vadd.f32 0.0, %v418
    %420 = vdwg.mxu0
    %v421 = vld [vmem:[%s2] sm:$0x1]
    %v423 = vlaneseq
    %v424 = vshrl.u32 %v423, 7
    %v425 = vsub.s32 0, %v424
    %v426 = vrot.slane %v421, %v425
    %v428 = vadd.f32 %v237, %v426
    %v429 = vadd.f32 %v241, %v426
    %v430 = vadd.f32 %v247, %v426
    %v431 = vadd.f32 %v251, %v426
    %v432 = vadd.f32 %v257, %v426
    %v433 = vadd.f32 %v261, %v426
    %v434 = vadd.f32 %v267, %v426
    %v435 = vadd.f32 %v271, %v426
    %v436 = vmax.f32 %v428, 0.0
    %v437 = vmax.f32 %v429, 0.0
    %v438 = vmax.f32 %v430, 0.0
    %v439 = vmax.f32 %v431, 0.0
    %v440 = vmax.f32 %v432, 0.0
    %v441 = vmax.f32 %v433, 0.0
    %v442 = vmax.f32 %v434, 0.0
    %v443 = vmax.f32 %v435, 0.0
    %v444 = vrot.slane %v436, 4
    %v445 = vmax.f32 %v436, %v444
    %v446 = vrot.slane %v445, 2
    %v447 = vmax.f32 %v445, %v446
    %v448 = vrot.slane %v447, 1
    %v449 = vmax.f32 %v447, %v448
    %v450 = vrot.slane %v437, 4
    %v451 = vmax.f32 %v437, %v450
    %v452 = vrot.slane %v451, 2
    %v453 = vmax.f32 %v451, %v452
    %v454 = vrot.slane %v453, 1
    %v455 = vmax.f32 %v453, %v454
    %v456 = vrot.slane %v438, 4
    %v457 = vmax.f32 %v438, %v456
    %v458 = vrot.slane %v457, 2
    %v459 = vmax.f32 %v457, %v458
    %v460 = vrot.slane %v459, 1
    %v461 = vmax.f32 %v459, %v460
    %v462 = vrot.slane %v439, 4
    %v463 = vmax.f32 %v439, %v462
    %v464 = vrot.slane %v463, 2
    %v465 = vmax.f32 %v463, %v464
    %v466 = vrot.slane %v465, 1
    %v467 = vmax.f32 %v465, %v466
    %v468 = vrot.slane %v440, 4
    %v469 = vmax.f32 %v440, %v468
    %v470 = vrot.slane %v469, 2
    %v471 = vmax.f32 %v469, %v470
    %v472 = vrot.slane %v471, 1
    %v473 = vmax.f32 %v471, %v472
    %v474 = vrot.slane %v441, 4
    %v475 = vmax.f32 %v441, %v474
    %v476 = vrot.slane %v475, 2
    %v477 = vmax.f32 %v475, %v476
    %v478 = vrot.slane %v477, 1
    %v479 = vmax.f32 %v477, %v478
    %v480 = vrot.slane %v442, 4
    %v481 = vmax.f32 %v442, %v480
    %v482 = vrot.slane %v481, 2
    %v483 = vmax.f32 %v481, %v482
    %v484 = vrot.slane %v483, 1
    %v485 = vmax.f32 %v483, %v484
    %v486 = vrot.slane %v443, 4
    %v487 = vmax.f32 %v443, %v486
    %v488 = vrot.slane %v487, 2
    %v489 = vmax.f32 %v487, %v488
    %v490 = vrot.slane %v489, 1
    %v491 = vmax.f32 %v489, %v490
    %v492 = vld [vmem:[#allocation5] sm:$0xff]
    %v493 = vld [vmem:[#allocation5 + $0x8] sm:$0xff]
    %v494 = vld [vmem:[#allocation5 + $0x10] sm:$0xff]
    %v495 = vld [vmem:[#allocation5 + $0x18] sm:$0xff]
    %v496 = vld [vmem:[#allocation5 + $0x20] sm:$0xff]
    %v497 = vld [vmem:[#allocation5 + $0x28] sm:$0xff]
    %v498 = vld [vmem:[#allocation5 + $0x30] sm:$0xff]
    %v499 = vld [vmem:[#allocation5 + $0x38] sm:$0xff]
    %v500 = vld [vmem:[#allocation5 + $0x40] sm:$0xff]
    %v501 = vld [vmem:[#allocation5 + $0x48] sm:$0xff]
    %v502 = vld [vmem:[#allocation5 + $0x50] sm:$0xff]
    %v503 = vld [vmem:[#allocation5 + $0x58] sm:$0xff]
    %v504 = vld [vmem:[#allocation5 + $0x60] sm:$0xff]
    %v505 = vld [vmem:[#allocation5 + $0x68] sm:$0xff]
    %v506 = vld [vmem:[#allocation5 + $0x70] sm:$0xff]
    %v507 = vld [vmem:[#allocation5 + $0x78] sm:$0xff]
    %v516 = vrot.slane %v310, 1
    %v517 = vrot.slane %v314, 1
    %v518 = vrot.slane %v320, 1
    %v519 = vrot.slane %v324, 1
    %v520 = vrot.slane %v330, 1
    %v521 = vrot.slane %v334, 1
    %v522 = vrot.slane %v340, 1
    %v523 = vrot.slane %v344, 1
    %v532 = vadd.f32 %v239, %v516
    %v533 = vadd.f32 %v243, %v517
    %v534 = vadd.f32 %v249, %v518
    %v535 = vadd.f32 %v253, %v519
    %v536 = vadd.f32 %v259, %v520
    %v537 = vadd.f32 %v263, %v521
    %v538 = vadd.f32 %v269, %v522
    %v539 = vadd.f32 %v273, %v523
    %v540 = vld [vmem:[%s3] sm:$0x1]
    %v542 = vlaneseq
    %v543 = vshrl.u32 %v542, 7
    %v544 = vsub.s32 0, %v543
    %v545 = vrot.slane %v540, %v544
    %v547 = vadd.f32 %v532, %v545
    %v548 = vadd.f32 %v533, %v545
    %v549 = vadd.f32 %v534, %v545
    %v550 = vadd.f32 %v535, %v545
    %v551 = vadd.f32 %v536, %v545
    %v552 = vadd.f32 %v537, %v545
    %v553 = vadd.f32 %v538, %v545
    %v554 = vadd.f32 %v539, %v545
    %v555 = vmax.f32 %v547, 0.0
    %v556 = vmax.f32 %v548, 0.0
    %v557 = vmax.f32 %v549, 0.0
    %v558 = vmax.f32 %v550, 0.0
    %v559 = vmax.f32 %v551, 0.0
    %v560 = vmax.f32 %v552, 0.0
    %v561 = vmax.f32 %v553, 0.0
    %v562 = vmax.f32 %v554, 0.0
    %vm563 = vcmask 1046528
    %v564 = vsel %vm563, %v555, -inf
    %v565 = vrot.slane %v564, 4
    %v566 = vmax.f32 %v564, %v565
    %v567 = vrot.slane %v566, 2
    %v568 = vmax.f32 %v566, %v567
    %v569 = vrot.slane %v568, 1
    %v570 = vmax.f32 %v568, %v569
    %v571 = vsel %vm563, %v556, -inf
    %v572 = vrot.slane %v571, 4
    %v573 = vmax.f32 %v571, %v572
    %v574 = vrot.slane %v573, 2
    %v575 = vmax.f32 %v573, %v574
    %v576 = vrot.slane %v575, 1
    %v577 = vmax.f32 %v575, %v576
    %v578 = vsel %vm563, %v557, -inf
    %v579 = vrot.slane %v578, 4
    %v580 = vmax.f32 %v578, %v579
    %v581 = vrot.slane %v580, 2
    %v582 = vmax.f32 %v580, %v581
    %v583 = vrot.slane %v582, 1
    %v584 = vmax.f32 %v582, %v583
    %v585 = vsel %vm563, %v558, -inf
    %v586 = vrot.slane %v585, 4
    %v587 = vmax.f32 %v585, %v586
    %v588 = vrot.slane %v587, 2
    %v589 = vmax.f32 %v587, %v588
    %v590 = vrot.slane %v589, 1
    %v591 = vmax.f32 %v589, %v590
    %v592 = vsel %vm563, %v559, -inf
    %v593 = vrot.slane %v592, 4
    %v594 = vmax.f32 %v592, %v593
    %v595 = vrot.slane %v594, 2
    %v596 = vmax.f32 %v594, %v595
    %v597 = vrot.slane %v596, 1
    %v598 = vmax.f32 %v596, %v597
    %v599 = vsel %vm563, %v560, -inf
    %v600 = vrot.slane %v599, 4
    %v601 = vmax.f32 %v599, %v600
    %v602 = vrot.slane %v601, 2
    %v603 = vmax.f32 %v601, %v602
    %v604 = vrot.slane %v603, 1
    %v605 = vmax.f32 %v603, %v604
    %v606 = vsel %vm563, %v561, -inf
    %v607 = vrot.slane %v606, 4
    %v608 = vmax.f32 %v606, %v607
    %v609 = vrot.slane %v608, 2
    %v610 = vmax.f32 %v608, %v609
    %v611 = vrot.slane %v610, 1
    %v612 = vmax.f32 %v610, %v611
    %v613 = vsel %vm563, %v562, -inf
    %v614 = vrot.slane %v613, 4
    %v615 = vmax.f32 %v613, %v614
    %v616 = vrot.slane %v615, 2
    %v617 = vmax.f32 %v615, %v616
    %v618 = vrot.slane %v617, 1
    %v619 = vmax.f32 %v617, %v618
    %v620 = vld [vmem:[#allocation7] sm:$0xff]
    %v621 = vld [vmem:[#allocation7 + $0x8] sm:$0xff]
    %v622 = vld [vmem:[#allocation7 + $0x10] sm:$0xff]
    %v623 = vld [vmem:[#allocation7 + $0x18] sm:$0xff]
    %v624 = vld [vmem:[#allocation7 + $0x20] sm:$0xff]
    %v625 = vld [vmem:[#allocation7 + $0x28] sm:$0xff]
    %v626 = vld [vmem:[#allocation7 + $0x30] sm:$0xff]
    %v627 = vld [vmem:[#allocation7 + $0x38] sm:$0xff]
    %v628 = vld [vmem:[#allocation7 + $0x40] sm:$0xff]
    %v629 = vld [vmem:[#allocation7 + $0x48] sm:$0xff]
    %v630 = vld [vmem:[#allocation7 + $0x50] sm:$0xff]
    %v631 = vld [vmem:[#allocation7 + $0x58] sm:$0xff]
    %v632 = vld [vmem:[#allocation7 + $0x60] sm:$0xff]
    %v633 = vld [vmem:[#allocation7 + $0x68] sm:$0xff]
    %v634 = vld [vmem:[#allocation7 + $0x70] sm:$0xff]
    %v635 = vld [vmem:[#allocation7 + $0x78] sm:$0xff]
    %vm644 = vcmask 1041409
    %v645 = vsel %vm644, %v577, %v570
    %vm646 = vcmask 1042434
    %v647 = vsel %vm646, %v584, %v645
    %vm648 = vcmask 1043459
    %v649 = vsel %vm648, %v591, %v647
    %vm650 = vcmask 1044484
    %v651 = vsel %vm650, %v598, %v649
    %vm652 = vcmask 1045509
    %v653 = vsel %vm652, %v605, %v651
    %vm654 = vcmask 1046534
    %v655 = vsel %vm654, %v612, %v653
    %vm656 = vcmask 1047559
    %v657 = vsel %vm656, %v619, %v655
    %659 = vmatprep.subr.mxu0 0.0
    %660 = vmatpush1.msra.mxu0 %v620
    %661 = vmatprep.subr.mxu0 0.0
    %662 = vmatpush1.msra.mxu0 %v621
    %663 = vmatprep.subr.mxu0 0.0
    %664 = vmatpush1.msra.mxu0 %v622
    %665 = vmatprep.subr.mxu0 0.0
    %666 = vmatpush1.msra.mxu0 %v623
    %667 = vmatprep.subr.mxu0 0.0
    %668 = vmatpush1.msra.mxu0 %v624
    %669 = vmatprep.subr.mxu0 0.0
    %670 = vmatpush1.msra.mxu0 %v625
    %671 = vmatprep.subr.mxu0 0.0
    %672 = vmatpush1.msra.mxu0 %v626
    %673 = vmatprep.subr.mxu0 0.0
    %674 = vmatpush1.msra.mxu0 %v627
    %675 = vmatprep.subr.mxu0 0.0
    %676 = vmatpush1.msra.mxu0 %v628
    %677 = vmatprep.subr.mxu0 0.0
    %678 = vmatpush1.msra.mxu0 %v629
    %679 = vmatprep.subr.mxu0 0.0
    %680 = vmatpush1.msra.mxu0 %v630
    %681 = vmatprep.subr.mxu0 0.0
    %682 = vmatpush1.msra.mxu0 %v631
    %683 = vmatprep.subr.mxu0 0.0
    %684 = vmatpush1.msra.mxu0 %v632
    %685 = vmatprep.subr.mxu0 0.0
    %686 = vmatpush1.msra.mxu0 %v633
    %687 = vmatprep.subr.mxu0 0.0
    %688 = vmatpush1.msra.mxu0 %v634
    %689 = vmatprep.subr.mxu0 0.0
    %690 = vmatpush1.msra.mxu0 %v635
    %691 = vmatprep.subr.mxu0 0.0
    %692 = vmatpush1.msra.mxu0 0.0
    %693 = vmatprep.subr.mxu0 0.0
    %694 = vmatpush1.msra.mxu0 0.0
    %695 = vmatprep.subr.mxu0 0.0
    %696 = vmatpush1.msra.mxu0 0.0
    %697 = vmatprep.subr.mxu0 0.0
    %698 = vmatpush1.msra.mxu0 0.0
    %699 = vmatprep.subr.mxu0 0.0
    %700 = vmatpush1.msra.mxu0 0.0
    %701 = vmatprep.subr.mxu0 0.0
    %702 = vmatpush1.msra.mxu0 0.0
    %703 = vmatprep.subr.mxu0 0.0
    %704 = vmatpush1.msra.mxu0 0.0
    %705 = vmatprep.subr.mxu0 0.0
    %706 = vmatpush1.msra.mxu0 0.0
    %707 = vmatprep.subr.mxu0 0.0
    %708 = vmatpush1.msra.mxu0 0.0
    %709 = vmatprep.subr.mxu0 0.0
    %710 = vmatpush1.msra.mxu0 0.0
    %711 = vmatprep.subr.mxu0 0.0
    %712 = vmatpush1.msra.mxu0 0.0
    %713 = vmatprep.subr.mxu0 0.0
    %714 = vmatpush1.msra.mxu0 0.0
    %715 = vmatprep.subr.mxu0 0.0
    %716 = vmatpush1.msra.mxu0 0.0
    %717 = vmatprep.subr.mxu0 0.0
    %718 = vmatpush1.msra.mxu0 0.0
    %719 = vmatprep.subr.mxu0 0.0
    %720 = vmatpush1.msra.mxu0 0.0
    %721 = vmatprep.subr.mxu0 0.0
    %722 = vmatpush1.msra.mxu0 0.0
    %723 = vmatprep.mubr.f32.mxu0 0.0
    %724 = vmatmul.mubr.f32.gmra.mrb[0].mxu0 %v657
    %v725 = vpop.f32.mrb[0].mxu0
    %v726 = vadd.f32 0.0, %v725
    %v727 = vpop.f32.mrb[0].mxu0
    %728 = vdwg.mxu0
    %v737 = vsel %vm644, %v455, %v449
    %v738 = vsel %vm646, %v461, %v737
    %v739 = vsel %vm648, %v467, %v738
    %v740 = vsel %vm650, %v473, %v739
    %v741 = vsel %vm652, %v479, %v740
    %v742 = vsel %vm654, %v485, %v741
    %v743 = vsel %vm656, %v491, %v742
    %745 = vmatprep.subr.mxu0 0.0
    %746 = vmatpush1.msra.mxu0 %v492
    %747 = vmatprep.subr.mxu0 0.0
    %748 = vmatpush1.msra.mxu0 %v493
    %749 = vmatprep.subr.mxu0 0.0
    %750 = vmatpush1.msra.mxu0 %v494
    %751 = vmatprep.subr.mxu0 0.0
    %752 = vmatpush1.msra.mxu0 %v495
    %753 = vmatprep.subr.mxu0 0.0
    %754 = vmatpush1.msra.mxu0 %v496
    %755 = vmatprep.subr.mxu0 0.0
    %756 = vmatpush1.msra.mxu0 %v497
    %757 = vmatprep.subr.mxu0 0.0
    %758 = vmatpush1.msra.mxu0 %v498
    %759 = vmatprep.subr.mxu0 0.0
    %760 = vmatpush1.msra.mxu0 %v499
    %761 = vmatprep.subr.mxu0 0.0
    %762 = vmatpush1.msra.mxu0 %v500
    %763 = vmatprep.subr.mxu0 0.0
    %764 = vmatpush1.msra.mxu0 %v501
    %765 = vmatprep.subr.mxu0 0.0
    %766 = vmatpush1.msra.mxu0 %v502
    %767 = vmatprep.subr.mxu0 0.0
    %768 = vmatpush1.msra.mxu0 %v503
    %769 = vmatprep.subr.mxu0 0.0
    %770 = vmatpush1.msra.mxu0 %v504
    %771 = vmatprep.subr.mxu0 0.0
    %772 = vmatpush1.msra.mxu0 %v505
    %773 = vmatprep.subr.mxu0 0.0
    %774 = vmatpush1.msra.mxu0 %v506
    %775 = vmatprep.subr.mxu0 0.0
    %776 = vmatpush1.msra.mxu0 %v507
    %777 = vmatprep.subr.mxu0 0.0
    %778 = vmatpush1.msra.mxu0 0.0
    %779 = vmatprep.subr.mxu0 0.0
    %780 = vmatpush1.msra.mxu0 0.0
    %781 = vmatprep.subr.mxu0 0.0
    %782 = vmatpush1.msra.mxu0 0.0
    %783 = vmatprep.subr.mxu0 0.0
    %784 = vmatpush1.msra.mxu0 0.0
    %785 = vmatprep.subr.mxu0 0.0
    %786 = vmatpush1.msra.mxu0 0.0
    %787 = vmatprep.subr.mxu0 0.0
    %788 = vmatpush1.msra.mxu0 0.0
    %789 = vmatprep.subr.mxu0 0.0
    %790 = vmatpush1.msra.mxu0 0.0
    %791 = vmatprep.subr.mxu0 0.0
    %792 = vmatpush1.msra.mxu0 0.0
    %793 = vmatprep.subr.mxu0 0.0
    %794 = vmatpush1.msra.mxu0 0.0
    %795 = vmatprep.subr.mxu0 0.0
    %796 = vmatpush1.msra.mxu0 0.0
    %797 = vmatprep.subr.mxu0 0.0
    %798 = vmatpush1.msra.mxu0 0.0
    %799 = vmatprep.subr.mxu0 0.0
    %800 = vmatpush1.msra.mxu0 0.0
    %801 = vmatprep.subr.mxu0 0.0
    %802 = vmatpush1.msra.mxu0 0.0
    %803 = vmatprep.subr.mxu0 0.0
    %804 = vmatpush1.msra.mxu0 0.0
    %805 = vmatprep.subr.mxu0 0.0
    %806 = vmatpush1.msra.mxu0 0.0
    %807 = vmatprep.subr.mxu0 0.0
    %808 = vmatpush1.msra.mxu0 0.0
    %809 = vmatprep.mubr.f32.mxu0 0.0
    %810 = vmatmul.mubr.f32.gmra.mrb[0].mxu0 %v743
    %v811 = vpop.f32.mrb[0].mxu0
    %v812 = vadd.f32 %v726, %v811
    %v813 = vpop.f32.mrb[0].mxu0
    %814 = vdwg.mxu0
    %v823 = vrot.slane %v383, 1
    %v824 = vrot.slane %v387, 1
    %v825 = vrot.slane %v393, 1
    %v826 = vrot.slane %v397, 1
    %v827 = vrot.slane %v403, 1
    %v828 = vrot.slane %v407, 1
    %v829 = vrot.slane %v413, 1
    %v830 = vrot.slane %v417, 1
    %v839 = vadd.f32 %v312, %v823
    %v840 = vadd.f32 %v316, %v824
    %v841 = vadd.f32 %v322, %v825
    %v842 = vadd.f32 %v326, %v826
    %v843 = vadd.f32 %v332, %v827
    %v844 = vadd.f32 %v336, %v828
    %v845 = vadd.f32 %v342, %v829
    %v846 = vadd.f32 %v346, %v830
    %v855 = vrot.slane %v385, 2
    %v856 = vrot.slane %v389, 2
    %v857 = vrot.slane %v395, 2
    %v858 = vrot.slane %v399, 2
    %v859 = vrot.slane %v405, 2
    %v860 = vrot.slane %v409, 2
    %v861 = vrot.slane %v415, 2
    %v862 = vrot.slane %v419, 2
    %v871 = vadd.f32 %v839, %v855
    %v872 = vadd.f32 %v840, %v856
    %v873 = vadd.f32 %v841, %v857
    %v874 = vadd.f32 %v842, %v858
    %v875 = vadd.f32 %v843, %v859
    %v876 = vadd.f32 %v844, %v860
    %v877 = vadd.f32 %v845, %v861
    %v878 = vadd.f32 %v846, %v862
    %v879 = vld [vmem:[%s4] sm:$0x1]
    %v881 = vlaneseq
    %v882 = vshrl.u32 %v881, 7
    %v883 = vsub.s32 0, %v882
    %v884 = vrot.slane %v879, %v883
    %v886 = vadd.f32 %v871, %v884
    %v887 = vadd.f32 %v872, %v884
    %v888 = vadd.f32 %v873, %v884
    %v889 = vadd.f32 %v874, %v884
    %v890 = vadd.f32 %v875, %v884
    %v891 = vadd.f32 %v876, %v884
    %v892 = vadd.f32 %v877, %v884
    %v893 = vadd.f32 %v878, %v884
    %v894 = vmax.f32 %v886, 0.0
    %v895 = vmax.f32 %v887, 0.0
    %v896 = vmax.f32 %v888, 0.0
    %v897 = vmax.f32 %v889, 0.0
    %v898 = vmax.f32 %v890, 0.0
    %v899 = vmax.f32 %v891, 0.0
    %v900 = vmax.f32 %v892, 0.0
    %v901 = vmax.f32 %v893, 0.0
    %vm902 = vcmask 1045504
    %v903 = vsel %vm902, %v894, -inf
    %v904 = vrot.slane %v903, 4
    %v905 = vmax.f32 %v903, %v904
    %v906 = vrot.slane %v905, 2
    %v907 = vmax.f32 %v905, %v906
    %v908 = vrot.slane %v907, 1
    %v909 = vmax.f32 %v907, %v908
    %v910 = vsel %vm902, %v895, -inf
    %v911 = vrot.slane %v910, 4
    %v912 = vmax.f32 %v910, %v911
    %v913 = vrot.slane %v912, 2
    %v914 = vmax.f32 %v912, %v913
    %v915 = vrot.slane %v914, 1
    %v916 = vmax.f32 %v914, %v915
    %v917 = vsel %vm902, %v896, -inf
    %v918 = vrot.slane %v917, 4
    %v919 = vmax.f32 %v917, %v918
    %v920 = vrot.slane %v919, 2
    %v921 = vmax.f32 %v919, %v920
    %v922 = vrot.slane %v921, 1
    %v923 = vmax.f32 %v921, %v922
    %v924 = vsel %vm902, %v897, -inf
    %v925 = vrot.slane %v924, 4
    %v926 = vmax.f32 %v924, %v925
    %v927 = vrot.slane %v926, 2
    %v928 = vmax.f32 %v926, %v927
    %v929 = vrot.slane %v928, 1
    %v930 = vmax.f32 %v928, %v929
    %v931 = vsel %vm902, %v898, -inf
    %v932 = vrot.slane %v931, 4
    %v933 = vmax.f32 %v931, %v932
    %v934 = vrot.slane %v933, 2
    %v935 = vmax.f32 %v933, %v934
    %v936 = vrot.slane %v935, 1
    %v937 = vmax.f32 %v935, %v936
    %v938 = vsel %vm902, %v899, -inf
    %v939 = vrot.slane %v938, 4
    %v940 = vmax.f32 %v938, %v939
    %v941 = vrot.slane %v940, 2
    %v942 = vmax.f32 %v940, %v941
    %v943 = vrot.slane %v942, 1
    %v944 = vmax.f32 %v942, %v943
    %v945 = vsel %vm902, %v900, -inf
    %v946 = vrot.slane %v945, 4
    %v947 = vmax.f32 %v945, %v946
    %v948 = vrot.slane %v947, 2
    %v949 = vmax.f32 %v947, %v948
    %v950 = vrot.slane %v949, 1
    %v951 = vmax.f32 %v949, %v950
    %v952 = vsel %vm902, %v901, -inf
    %v953 = vrot.slane %v952, 4
    %v954 = vmax.f32 %v952, %v953
    %v955 = vrot.slane %v954, 2
    %v956 = vmax.f32 %v954, %v955
    %v957 = vrot.slane %v956, 1
    %v958 = vmax.f32 %v956, %v957
    %v959 = vld [vmem:[#allocation8] sm:$0xff]
    %v960 = vld [vmem:[#allocation8 + $0x8] sm:$0xff]
    %v961 = vld [vmem:[#allocation8 + $0x10] sm:$0xff]
    %v962 = vld [vmem:[#allocation8 + $0x18] sm:$0xff]
    %v963 = vld [vmem:[#allocation8 + $0x20] sm:$0xff]
    %v964 = vld [vmem:[#allocation8 + $0x28] sm:$0xff]
    %v965 = vld [vmem:[#allocation8 + $0x30] sm:$0xff]
    %v966 = vld [vmem:[#allocation8 + $0x38] sm:$0xff]
    %v967 = vld [vmem:[#allocation8 + $0x40] sm:$0xff]
    %v968 = vld [vmem:[#allocation8 + $0x48] sm:$0xff]
    %v969 = vld [vmem:[#allocation8 + $0x50] sm:$0xff]
    %v970 = vld [vmem:[#allocation8 + $0x58] sm:$0xff]
    %v971 = vld [vmem:[#allocation8 + $0x60] sm:$0xff]
    %v972 = vld [vmem:[#allocation8 + $0x68] sm:$0xff]
    %v973 = vld [vmem:[#allocation8 + $0x70] sm:$0xff]
    %v974 = vld [vmem:[#allocation8 + $0x78] sm:$0xff]
    %v983 = vsel %vm644, %v916, %v909
    %v984 = vsel %vm646, %v923, %v983
    %v985 = vsel %vm648, %v930, %v984
    %v986 = vsel %vm650, %v937, %v985
    %v987 = vsel %vm652, %v944, %v986
    %v988 = vsel %vm654, %v951, %v987
    %v989 = vsel %vm656, %v958, %v988
    %991 = vmatprep.subr.mxu0 0.0
    %992 = vmatpush1.msra.mxu0 %v959
    %993 = vmatprep.subr.mxu0 0.0
    %994 = vmatpush1.msra.mxu0 %v960
    %995 = vmatprep.subr.mxu0 0.0
    %996 = vmatpush1.msra.mxu0 %v961
    %997 = vmatprep.subr.mxu0 0.0
    %998 = vmatpush1.msra.mxu0 %v962
    %999 = vmatprep.subr.mxu0 0.0
    %1000 = vmatpush1.msra.mxu0 %v963
    %1001 = vmatprep.subr.mxu0 0.0
    %1002 = vmatpush1.msra.mxu0 %v964
    %1003 = vmatprep.subr.mxu0 0.0
    %1004 = vmatpush1.msra.mxu0 %v965
    %1005 = vmatprep.subr.mxu0 0.0
    %1006 = vmatpush1.msra.mxu0 %v966
    %1007 = vmatprep.subr.mxu0 0.0
    %1008 = vmatpush1.msra.mxu0 %v967
    %1009 = vmatprep.subr.mxu0 0.0
    %1010 = vmatpush1.msra.mxu0 %v968
    %1011 = vmatprep.subr.mxu0 0.0
    %1012 = vmatpush1.msra.mxu0 %v969
    %1013 = vmatprep.subr.mxu0 0.0
    %1014 = vmatpush1.msra.mxu0 %v970
    %1015 = vmatprep.subr.mxu0 0.0
    %1016 = vmatpush1.msra.mxu0 %v971
    %1017 = vmatprep.subr.mxu0 0.0
    %1018 = vmatpush1.msra.mxu0 %v972
    %1019 = vmatprep.subr.mxu0 0.0
    %1020 = vmatpush1.msra.mxu0 %v973
    %1021 = vmatprep.subr.mxu0 0.0
    %1022 = vmatpush1.msra.mxu0 %v974
    %1023 = vmatprep.subr.mxu0 0.0
    %1024 = vmatpush1.msra.mxu0 0.0
    %1025 = vmatprep.subr.mxu0 0.0
    %1026 = vmatpush1.msra.mxu0 0.0
    %1027 = vmatprep.subr.mxu0 0.0
    %1028 = vmatpush1.msra.mxu0 0.0
    %1029 = vmatprep.subr.mxu0 0.0
    %1030 = vmatpush1.msra.mxu0 0.0
    %1031 = vmatprep.subr.mxu0 0.0
    %1032 = vmatpush1.msra.mxu0 0.0
    %1033 = vmatprep.subr.mxu0 0.0
    %1034 = vmatpush1.msra.mxu0 0.0
    %1035 = vmatprep.subr.mxu0 0.0
    %1036 = vmatpush1.msra.mxu0 0.0
    %1037 = vmatprep.subr.mxu0 0.0
    %1038 = vmatpush1.msra.mxu0 0.0
    %1039 = vmatprep.subr.mxu0 0.0
    %1040 = vmatpush1.msra.mxu0 0.0
    %1041 = vmatprep.subr.mxu0 0.0
    %1042 = vmatpush1.msra.mxu0 0.0
    %1043 = vmatprep.subr.mxu0 0.0
    %1044 = vmatpush1.msra.mxu0 0.0
    %1045 = vmatprep.subr.mxu0 0.0
    %1046 = vmatpush1.msra.mxu0 0.0
    %1047 = vmatprep.subr.mxu0 0.0
    %1048 = vmatpush1.msra.mxu0 0.0
    %1049 = vmatprep.subr.mxu0 0.0
    %1050 = vmatpush1.msra.mxu0 0.0
    %1051 = vmatprep.subr.mxu0 0.0
    %1052 = vmatpush1.msra.mxu0 0.0
    %1053 = vmatprep.subr.mxu0 0.0
    %1054 = vmatpush1.msra.mxu0 0.0
    %1055 = vmatprep.mubr.f32.mxu0 0.0
    %1056 = vmatmul.mubr.f32.gmra.mrb[0].mxu0 %v989
    %v1057 = vpop.f32.mrb[0].mxu0
    %v1058 = vadd.f32 0.0, %v1057
    %v1059 = vpop.f32.mrb[0].mxu0
    %1060 = vdwg.mxu0
    %v1061 = vadd.f32 %v812, %v1058
    %v1062 = vld [vmem:[%s8] sm:$0x1]
    %v1064 = vlaneseq
    %v1065 = vshrl.u32 %v1064, 7
    %v1066 = vsub.s32 0, %v1065
    %v1067 = vrot.slane %v1062, %v1066
    %v1069 = vadd.f32 %v1061, %v1067
    %1070 = vst [vmem:[#allocation10] sm:$0xff] %v1069
    // Predicated region
    $region54: #{tpu_custom_call.1} parent=1 // pred_check
      _
    $region55: #{tpu_custom_call.1} parent=1 // pred_check_branch
      %1072 = sbr.rel (0) target = $region57
    $region56: #{tpu_custom_call.1} parent=1 // pred_region
      %s1074 = ssub.s32 128, 128
      %1075 = vsyncadd [#allocation4], %s1074
      %s1077 = sshll.u32 [#allocation10], 4
      %s1078 = int_to_ptr.vmem [resolvable:$true] %s1077
      %1080 = dma.vmem_to_hbm [thread:$0]  %s1078, 128, %s9, [#allocation4]
    $region57: #{tpu_custom_call.1} parent=1 // pred_fallthru
      _
    // Predicated region
    $region58: #{tpu_custom_call.1} parent=1 // pred_check
      _
    $region59: #{tpu_custom_call.1} parent=1 // pred_check_branch
      %1082 = sbr.rel (0) target = $region61
    $region60: #{tpu_custom_call.1} parent=1 // pred_region
      %1083 = dma.done [#allocation4], 128
    $region61: #{tpu_custom_call.1} parent=1 // pred_fallthru
      _
    %1084 = vsyncpa [#allocation3], 1
    %1085 = vsyncpa [#allocation6], 1
    %1086 = vsyncpa [#allocation9], 1
    %1087 = vsyncpa [#allocation4], 1

</llo_original>
